<compile_context>
chip_gen: v7x
topology: tpu7x:2x2x1
jax: 0.10.0
libtpu: 0.0.40
codegen_flags: <defaults>
</compile_context>

<pallas_src>
import jax
import jax.numpy as jnp
from jax.experimental import pallas as pl
from jax.experimental.pallas import tpu as pltpu

_INV_SQRT2 = 0.7071067811865476  # 1/sqrt(2), exact (erf) GELU
_LN_EPS = 1e-5                   # torch.nn.LayerNorm default eps


def bridge_kernel(q_ref, c_ref, r_ref, wa_ref, wb_ref, m_ref, p_ref, o_ref):
    """q,c:(tm,D)  r:(tm,1)  wa,wb:(D,Npad)  m:(Npad,Npad) avg-matrix  p:(3,Npad)."""
    d = q_ref.shape[-1]
    npad = o_ref.shape[-1]
    mxu_dt = wa_ref.dtype

    r = r_ref[...].astype(jnp.float32)                      # (tm, 1)

    # Two lane-dense MXU matmuls; the r* scaling is folded in afterwards as
    # per-row lane masks (free VPU filler under the MXU/DMA work).
    a = jnp.dot(q_ref[...].astype(mxu_dt), wa_ref[...],
                preferred_element_type=jnp.float32)          # (tm, Npad)
    b = jnp.dot(c_ref[...].astype(mxu_dt), wb_ref[...],
                preferred_element_type=jnp.float32)          # (tm, Npad)

    col = jax.lax.broadcasted_iota(jnp.int32, (1, npad), 1)
    in_q_half = col < d                                      # cols 0:D -> quantum half
    s_a = jnp.where(in_q_half, jnp.float32(1.0), r)          # (tm, Npad)
    s_b = jnp.where(in_q_half, r, jnp.float32(1.0))

    h = a * s_a + b * s_b + p_ref[0:1, :]                    # + packed bias [bq|bc|0]

    # Per-half LayerNorm via MXU block-averaging matrix: mean/var arrive already
    # broadcast across lanes; no reshape / XLU cross-lane reduction needed.
    mean_b = jnp.dot(h, m_ref[...], preferred_element_type=jnp.float32)
    hc = h - mean_b
    var_b = jnp.dot(hc * hc, m_ref[...], preferred_element_type=jnp.float32)
    hn = hc * jax.lax.rsqrt(var_b + jnp.float32(_LN_EPS))
    hn = hn * p_ref[1:2, :] + p_ref[2:3, :]                  # packed gamma / beta

    # Exact GELU (PyTorch default, erf-based).
    out = 0.5 * hn * (1.0 + jax.lax.erf(hn * jnp.float32(_INV_SQRT2)))
    o_ref[...] = out.astype(o_ref.dtype)


def _round_up(x, m):
    return ((x + m - 1) // m) * m


def _pack_params(params, mxu_dtype, npad):
    """Pack weights/vectors into lane-dense, MXU-friendly resident arrays."""
    d = params["wq"].shape[1]

    # Wa cols 0:D = Wq_top, cols D:2D = Wc_bot ; Wb cols 0:D = Wq_bot, D:2D = Wc_top.
    wa = jnp.zeros((d, npad), jnp.float32)
    wa = wa.at[:, :d].set(params["wq"][:d, :])
    wa = wa.at[:, d:2 * d].set(params["wc"][d:, :])
    wb = jnp.zeros((d, npad), jnp.float32)
    wb = wb.at[:, :d].set(params["wq"][d:, :])
    wb = wb.at[:, d:2 * d].set(params["wc"][:d, :])

    def pad_vec(v):  # (1, 2D) -> (1, Npad), zero padded
        return jnp.pad(v, ((0, 0), (0, npad - v.shape[-1])))

    vec = jnp.concatenate(
        [
            pad_vec(jnp.concatenate([params["bq"], params["bc"]], axis=-1)),
            pad_vec(jnp.concatenate([params["gq"], params["gc"]], axis=-1)),
            pad_vec(jnp.concatenate([params["betaq"], params["betac"]], axis=-1)),
        ],
        axis=0,
    ).astype(jnp.float32)                                    # (3, Npad)

    # Block-averaging matrix: M[i,j] = 1/D iff i,j in same D-block within 0:2D.
    idx = jnp.arange(npad)
    blk = idx // d
    same = (blk[:, None] == blk[None, :]) & (idx[:, None] < 2 * d) & (idx[None, :] < 2 * d)
    m_avg = jnp.where(same, 1.0 / d, 0.0).astype(jnp.float32)

    return wa.astype(mxu_dtype), wb.astype(mxu_dtype), m_avg, vec


def bridge_layer(quantum_state, classical_state, resonance, params,
                 *, block_b=2048, mxu_dtype=jnp.bfloat16, out_dtype=None):
    """Pallas wrapper: fused Linear+LayerNorm+GELU over a parallel batch grid."""
    B, D = quantum_state.shape
    npad = max(128, _round_up(2 * D, 128))            # lane-dense output width
    out_dtype = quantum_state.dtype if out_dtype is None else out_dtype

    wa, wb, m_avg, vec = _pack_params(params, mxu_dtype, npad)

    # Batch tile: large enough to amortize ~0.35us/step overhead, but chosen so
    # the parallel batch axis has >=2 steps (shards across both v7x TensorCores).
    if B <= 8:
        tm = B                                        # tiny case: single full block
    else:
        tm = min(block_b, max(8, _round_up(pl.cdiv(B, 2), 8)))
    grid = (pl.cdiv(B, tm),)

    r = resonance
    if r.ndim == 1:
        r = r[:, None]
    r = r.astype(jnp.float32)

    y = pl.pallas_call(
        bridge_kernel,
        out_shape=jax.ShapeDtypeStruct((B, npad), out_dtype),
        grid_spec=pltpu.PrefetchScalarGridSpec(
            num_scalar_prefetch=0,
            grid=grid,
            in_specs=[
                pl.BlockSpec((tm, D), lambda i: (i, 0)),        # quantum_state
                pl.BlockSpec((tm, D), lambda i: (i, 0)),        # classical_state
                pl.BlockSpec((tm, 1), lambda i: (i, 0)),        # resonance
                pl.BlockSpec((D, npad), lambda i: (0, 0)),      # Wa (resident)
                pl.BlockSpec((D, npad), lambda i: (0, 0)),      # Wb (resident)
                pl.BlockSpec((npad, npad), lambda i: (0, 0)),   # avg matrix (resident)
                pl.BlockSpec((3, npad), lambda i: (0, 0)),      # bias/gamma/beta
            ],
            out_specs=pl.BlockSpec((tm, npad), lambda i: (i, 0)),
        ),
        compiler_params=pltpu.CompilerParams(
            dimension_semantics=("parallel",)),
    )(quantum_state, classical_state, r, wa, wb, m_avg, vec)

    return y[:, :D], y[:, D:2 * D]


def reference(quantum_state, classical_state, resonance, params):
    """Pure-JAX reference for correctness checking."""
    def transform(x, w, b, g, beta):
        h = x @ w + b
        mu = jnp.mean(h, axis=-1, keepdims=True)
        var = jnp.mean((h - mu) ** 2, axis=-1, keepdims=True)
        hn = (h - mu) / jnp.sqrt(var + _LN_EPS)
        hn = hn * g + beta
        return jax.nn.gelu(hn, approximate=False)

    q_in = jnp.concatenate([quantum_state, resonance * classical_state], axis=-1)
    c_in = jnp.concatenate([classical_state, resonance * quantum_state], axis=-1)
    q_out = transform(q_in, params["wq"], params["bq"], params["gq"], params["betaq"])
    c_out = transform(c_in, params["wc"], params["bc"], params["gc"], params["betac"])
    return q_out, c_out


if __name__ == "__main__":
    # BridgeConfig(quantum_dim=32, classical_dim=32)
    B, D = 2, 32
    key = jax.random.PRNGKey(0)
    keys = jax.random.split(key, 8)

    # nn.Linear(2D, D) + nn.LayerNorm(D) parameters (weights stored [in, out]).
    bound = 1.0 / jnp.sqrt(2.0 * D)
    params = {
        "wq": jax.random.uniform(keys[0], (2 * D, D), jnp.float32, -bound, bound),
        "bq": jax.random.uniform(keys[1], (1, D), jnp.float32, -bound, bound),
        "gq": jnp.ones((1, D), jnp.float32),
        "betaq": jnp.zeros((1, D), jnp.float32),
        "wc": jax.random.uniform(keys[2], (2 * D, D), jnp.float32, -bound, bound),
        "bc": jax.random.uniform(keys[3], (1, D), jnp.float32, -bound, bound),
        "gc": jnp.ones((1, D), jnp.float32),
        "betac": jnp.zeros((1, D), jnp.float32),
    }

    quantum_state = jax.random.normal(keys[4], (B, D), jnp.float32)
    classical_state = jax.random.normal(keys[5], (B, D), jnp.float32)
    resonance = jax.random.uniform(keys[6], (B, 1), jnp.float32)

    q_ref_out, c_ref_out = reference(quantum_state, classical_state, resonance, params)

    # 1) f32 MXU operands: near-exact math (tight tolerance).
    q32, c32 = bridge_layer(quantum_state, classical_state, resonance, params,
                            mxu_dtype=jnp.float32)
    jax.block_until_ready((q32, c32))
    assert jnp.allclose(q32, q_ref_out, atol=3e-5, rtol=3e-5), "quantum mismatch (f32)"
    assert jnp.allclose(c32, c_ref_out, atol=3e-5, rtol=3e-5), "classical mismatch (f32)"

    # 2) bf16 MXU operands (MXU-native fast path): relaxed tolerance.
    qbf, cbf = bridge_layer(quantum_state, classical_state, resonance, params,
                            mxu_dtype=jnp.bfloat16)
    jax.block_until_ready((qbf, cbf))
    assert jnp.allclose(qbf, q_ref_out, atol=5e-2, rtol=5e-2), "quantum mismatch (bf16)"
    assert jnp.allclose(cbf, c_ref_out, atol=5e-2, rtol=5e-2), "classical mismatch (bf16)"

    # 3) Gridded path: multiple batch tiles on the parallel grid axis.
    B2 = 64
    k2 = jax.random.split(keys[7], 3)
    q2 = jax.random.normal(k2[0], (B2, D), jnp.float32)
    c2 = jax.random.normal(k2[1], (B2, D), jnp.float32)
    r2 = jax.random.uniform(k2[2], (B2, 1), jnp.float32)
    q2o, c2o = bridge_layer(q2, c2, r2, params, block_b=16, mxu_dtype=jnp.float32)
    jax.block_until_ready((q2o, c2o))
    q2r, c2r = reference(q2, c2, r2, params)
    assert jnp.allclose(q2o, q2r, atol=3e-5, rtol=3e-5), "quantum mismatch (gridded)"
    assert jnp.allclose(c2o, c2r, atol=3e-5, rtol=3e-5), "classical mismatch (gridded)"

    # 4) Partial final tile (B % tm != 0): masked writeback, valid rows exact.
    B3 = 50
    k3 = jax.random.split(k2[2], 3)
    q3 = jax.random.normal(k3[0], (B3, D), jnp.float32)
    c3 = jax.random.normal(k3[1], (B3, D), jnp.float32)
    r3 = jax.random.uniform(k3[2], (B3, 1), jnp.float32)
    q3o, c3o = bridge_layer(q3, c3, r3, params, mxu_dtype=jnp.float32)
    jax.block_until_ready((q3o, c3o))
    q3r, c3r = reference(q3, c3, r3, params)
    assert jnp.allclose(q3o, q3r, atol=3e-5, rtol=3e-5), "quantum mismatch (partial tile)"
    assert jnp.allclose(c3o, c3r, atol=3e-5, rtol=3e-5), "classical mismatch (partial tile)"

    print("KERNEL_OK")
</pallas_src>

<mosaic_0001>
module attributes {stable_mosaic.version = 11 : i64} {
  func.func @bridge_kernel(%arg0: i32, %arg1: memref<2x32xf32, #tpu.memory_space<vmem>>, %arg2: memref<2x32xf32, #tpu.memory_space<vmem>>, %arg3: memref<2x1xf32, #tpu.memory_space<vmem>>, %arg4: memref<32x128xf32, #tpu.memory_space<vmem>>, %arg5: memref<32x128xf32, #tpu.memory_space<vmem>>, %arg6: memref<128x128xf32, #tpu.memory_space<vmem>>, %arg7: memref<3x128xf32, #tpu.memory_space<vmem>>, %arg8: memref<2x128xf32, #tpu.memory_space<vmem>>) attributes {dimension_semantics = [#tpu.dimension_semantics<parallel>], iteration_bounds = array<i64: 1>, scalar_prefetch = 0 : i64, scratch_operands = 0 : i64, tpu.core_type = #tpu.core_type<tc>, window_params = [{transform_indices = @transform_0, window_bounds = array<i64: 2, 32>}, {transform_indices = @transform_1, window_bounds = array<i64: 2, 32>}, {transform_indices = @transform_2, window_bounds = array<i64: 2, 1>}, {pipeline_mode = #tpu.pipeline_mode<synchronous>, transform_indices = @transform_3, window_bounds = array<i64: 32, 128>}, {pipeline_mode = #tpu.pipeline_mode<synchronous>, transform_indices = @transform_4, window_bounds = array<i64: 32, 128>}, {pipeline_mode = #tpu.pipeline_mode<synchronous>, transform_indices = @transform_5, window_bounds = array<i64: 128, 128>}, {pipeline_mode = #tpu.pipeline_mode<synchronous>, transform_indices = @transform_6, window_bounds = array<i64: 3, 128>}, {transform_indices = @transform_7, window_bounds = array<i64: 2, 128>}]} {
    %c0 = arith.constant 0 : index
    %c0_0 = arith.constant 0 : index
    %0 = vector.load %arg3[%c0, %c0_0] : memref<2x1xf32, #tpu.memory_space<vmem>>, vector<2x1xf32>
    %c0_1 = arith.constant 0 : index
    %c0_2 = arith.constant 0 : index
    %1 = vector.load %arg1[%c0_1, %c0_2] : memref<2x32xf32, #tpu.memory_space<vmem>>, vector<2x32xf32>
    %c0_3 = arith.constant 0 : index
    %c0_4 = arith.constant 0 : index
    %2 = vector.load %arg4[%c0_3, %c0_4] : memref<32x128xf32, #tpu.memory_space<vmem>>, vector<32x128xf32>
    %cst = arith.constant dense<0.000000e+00> : vector<2x128xf32>
    %3 = tpu.matmul %1, %2, %cst {dimension_numbers = #tpu.dot_dimension_numbers<[1], [0], [0], [1], [0, 0, 1, 1], [], []>} : vector<2x32xf32>, vector<32x128xf32>, vector<2x128xf32> -> vector<2x128xf32>
    %c0_5 = arith.constant 0 : index
    %c0_6 = arith.constant 0 : index
    %4 = vector.load %arg2[%c0_5, %c0_6] : memref<2x32xf32, #tpu.memory_space<vmem>>, vector<2x32xf32>
    %c0_7 = arith.constant 0 : index
    %c0_8 = arith.constant 0 : index
    %5 = vector.load %arg5[%c0_7, %c0_8] : memref<32x128xf32, #tpu.memory_space<vmem>>, vector<32x128xf32>
    %cst_9 = arith.constant dense<0.000000e+00> : vector<2x128xf32>
    %6 = tpu.matmul %4, %5, %cst_9 {dimension_numbers = #tpu.dot_dimension_numbers<[1], [0], [0], [1], [0, 0, 1, 1], [], []>} : vector<2x32xf32>, vector<32x128xf32>, vector<2x128xf32> -> vector<2x128xf32>
    %7 = tpu.iota {dimensions = array<i32: 1>} : vector<1x128xi32>
    %c32_i32 = arith.constant 32 : i32
    %8 = vector.broadcast %c32_i32 : i32 to vector<1x128xi32>
    %9 = arith.cmpi slt, %7, %8 : vector<1x128xi32>
    %cst_10 = arith.constant 1.000000e+00 : f32
    %10 = vector.shape_cast %9 : vector<1x128xi1> to vector<1x128xi1>
    %11 = vector.broadcast %10 : vector<1x128xi1> to vector<2x128xi1>
    %12 = vector.broadcast %cst_10 : f32 to vector<2x128xf32>
    %13 = vector.shape_cast %0 : vector<2x1xf32> to vector<2x1xf32>
    %14 = vector.broadcast %13 : vector<2x1xf32> to vector<2x128xf32>
    %15 = arith.select %11, %12, %14 : vector<2x128xi1>, vector<2x128xf32>
    %cst_11 = arith.constant 1.000000e+00 : f32
    %16 = vector.shape_cast %9 : vector<1x128xi1> to vector<1x128xi1>
    %17 = vector.broadcast %16 : vector<1x128xi1> to vector<2x128xi1>
    %18 = vector.shape_cast %0 : vector<2x1xf32> to vector<2x1xf32>
    %19 = vector.broadcast %18 : vector<2x1xf32> to vector<2x128xf32>
    %20 = vector.broadcast %cst_11 : f32 to vector<2x128xf32>
    %21 = arith.select %17, %19, %20 : vector<2x128xi1>, vector<2x128xf32>
    %22 = arith.mulf %3, %15 : vector<2x128xf32>
    %23 = arith.mulf %6, %21 : vector<2x128xf32>
    %24 = arith.addf %22, %23 : vector<2x128xf32>
    %c0_12 = arith.constant 0 : index
    %c0_13 = arith.constant 0 : index
    %25 = vector.load %arg7[%c0_12, %c0_13] : memref<3x128xf32, #tpu.memory_space<vmem>>, vector<1x128xf32>
    %26 = vector.broadcast %25 : vector<1x128xf32> to vector<2x128xf32>
    %27 = arith.addf %24, %26 : vector<2x128xf32>
    %c0_14 = arith.constant 0 : index
    %c0_15 = arith.constant 0 : index
    %28 = vector.load %arg6[%c0_14, %c0_15] : memref<128x128xf32, #tpu.memory_space<vmem>>, vector<128x128xf32>
    %cst_16 = arith.constant dense<0.000000e+00> : vector<2x128xf32>
    %29 = tpu.matmul %27, %28, %cst_16 {dimension_numbers = #tpu.dot_dimension_numbers<[1], [0], [0], [1], [0, 0, 1, 1], [], []>} : vector<2x128xf32>, vector<128x128xf32>, vector<2x128xf32> -> vector<2x128xf32>
    %30 = arith.subf %27, %29 : vector<2x128xf32>
    %31 = arith.mulf %30, %30 : vector<2x128xf32>
    %c0_17 = arith.constant 0 : index
    %c0_18 = arith.constant 0 : index
    %32 = vector.load %arg6[%c0_17, %c0_18] : memref<128x128xf32, #tpu.memory_space<vmem>>, vector<128x128xf32>
    %cst_19 = arith.constant dense<0.000000e+00> : vector<2x128xf32>
    %33 = tpu.matmul %31, %32, %cst_19 {dimension_numbers = #tpu.dot_dimension_numbers<[1], [0], [0], [1], [0, 0, 1, 1], [], []>} : vector<2x128xf32>, vector<128x128xf32>, vector<2x128xf32> -> vector<2x128xf32>
    %cst_20 = arith.constant 9.99999974E-6 : f32
    %34 = vector.broadcast %cst_20 : f32 to vector<2x128xf32>
    %35 = arith.addf %33, %34 : vector<2x128xf32>
    %36 = math.rsqrt %35 : vector<2x128xf32>
    %37 = arith.mulf %30, %36 : vector<2x128xf32>
    %c1 = arith.constant 1 : index
    %c0_21 = arith.constant 0 : index
    %38 = vector.load %arg7[%c1, %c0_21] : memref<3x128xf32, #tpu.memory_space<vmem>>, vector<1x128xf32>
    %39 = vector.broadcast %38 : vector<1x128xf32> to vector<2x128xf32>
    %40 = arith.mulf %37, %39 : vector<2x128xf32>
    %c2 = arith.constant 2 : index
    %c0_22 = arith.constant 0 : index
    %41 = vector.load %arg7[%c2, %c0_22] : memref<3x128xf32, #tpu.memory_space<vmem>>, vector<1x128xf32>
    %42 = vector.broadcast %41 : vector<1x128xf32> to vector<2x128xf32>
    %43 = arith.addf %40, %42 : vector<2x128xf32>
    %cst_23 = arith.constant 5.000000e-01 : f32
    %44 = vector.broadcast %cst_23 : f32 to vector<2x128xf32>
    %45 = arith.mulf %44, %43 : vector<2x128xf32>
    %cst_24 = arith.constant 0.707106769 : f32
    %46 = vector.broadcast %cst_24 : f32 to vector<2x128xf32>
    %47 = arith.mulf %43, %46 : vector<2x128xf32>
    %48 = math.erf %47 : vector<2x128xf32>
    %cst_25 = arith.constant 1.000000e+00 : f32
    %49 = vector.broadcast %cst_25 : f32 to vector<2x128xf32>
    %50 = arith.addf %49, %48 : vector<2x128xf32>
    %51 = arith.mulf %45, %50 : vector<2x128xf32>
    %c0_26 = arith.constant 0 : index
    %c0_27 = arith.constant 0 : index
    %52 = vector.load %arg8[%c0_26, %c0_27] : memref<2x128xf32, #tpu.memory_space<vmem>>, vector<2x128xf32>
    tpu.vector_store %arg8[%c0_26, %c0_27], %51 {strides = array<i32>} : memref<2x128xf32, #tpu.memory_space<vmem>>, vector<2x128xf32>,
    return
  }
  func.func @transform_0(%arg0: i32) -> (i32, i32) {
    %c0_i32 = arith.constant 0 : i32
    %c0_i32_0 = arith.constant 0 : i32
    return %arg0, %c0_i32 : i32, i32
  }
  func.func @transform_1(%arg0: i32) -> (i32, i32) {
    %c0_i32 = arith.constant 0 : i32
    %c0_i32_0 = arith.constant 0 : i32
    return %arg0, %c0_i32 : i32, i32
  }
  func.func @transform_2(%arg0: i32) -> (i32, i32) {
    %c0_i32 = arith.constant 0 : i32
    %c0_i32_0 = arith.constant 0 : i32
    return %arg0, %c0_i32 : i32, i32
  }
  func.func @transform_3(%arg0: i32) -> (i32, i32) {
    %c0_i32 = arith.constant 0 : i32
    %c0_i32_0 = arith.constant 0 : i32
    %c0_i32_1 = arith.constant 0 : i32
    return %c0_i32, %c0_i32_0 : i32, i32
  }
  func.func @transform_4(%arg0: i32) -> (i32, i32) {
    %c0_i32 = arith.constant 0 : i32
    %c0_i32_0 = arith.constant 0 : i32
    %c0_i32_1 = arith.constant 0 : i32
    return %c0_i32, %c0_i32_0 : i32, i32
  }
  func.func @transform_5(%arg0: i32) -> (i32, i32) {
    %c0_i32 = arith.constant 0 : i32
    %c0_i32_0 = arith.constant 0 : i32
    %c0_i32_1 = arith.constant 0 : i32
    return %c0_i32, %c0_i32_0 : i32, i32
  }
  func.func @transform_6(%arg0: i32) -> (i32, i32) {
    %c0_i32 = arith.constant 0 : i32
    %c0_i32_0 = arith.constant 0 : i32
    %c0_i32_1 = arith.constant 0 : i32
    return %c0_i32, %c0_i32_0 : i32, i32
  }
  func.func @transform_7(%arg0: i32) -> (i32, i32) {
    %c0_i32 = arith.constant 0 : i32
    %c0_i32_0 = arith.constant 0 : i32
    return %arg0, %c0_i32 : i32, i32
  }
}

</mosaic_0001>

<llo_original>
// kernel: tpu_custom_call.1
$region0: #{tpu_custom_call.1}
  #allocation0 [shape = 'u32[]', space=smem, size = 0x4, offset = 0x4, fixed_abs, tag = 'smem constant byte address 0x4 - core index']
  #allocation1 [shape = 'u32[144,128]{1,0:T(1,128)}', space=vmem, size = 0x12000, scoped, tag = 'internal scratch']
  %s0 = inlined_call_operand.vmem [shape: f32[2,32], index: 0, kind: input, shape index: {}]
  %s1 = inlined_call_operand.hbm [shape: f32[2,32], index: 1, kind: input, shape index: {}]
  %s2 = inlined_call_operand.vmem [shape: f32[2,1], index: 2, kind: input, shape index: {}]
  %s3 = inlined_call_operand.hbm [shape: f32[32,128], index: 3, kind: input, shape index: {}]
  %s4 = inlined_call_operand.hbm [shape: f32[32,128], index: 4, kind: input, shape index: {}]
  %s5 = inlined_call_operand.hbm [shape: f32[128,128], index: 5, kind: input, shape index: {}]
  %s6 = inlined_call_operand.vmem [shape: f32[3,128], index: 6, kind: input, shape index: {}]
  %s7 = inlined_call_operand.hbm [shape: f32[2,128], index: 7, kind: output, shape index: {}]
  %s8 = sld [smem:[#allocation0]]
  $region54: #{tpu_custom_call.1} parent=0
    _
  %s10 = ssub.s32 1, %s8
  %s11 = scalar_select 0, %s10, %s8
  $region1: #{tpu_custom_call.1} parent=0
    #allocation2 [shape = 'u8[1024]{0}', space=vmem, size = 0x400, scoped, tag = 'input window, operand 1, single buffered']
    #allocation3 [shape = 's32[1]{0}', space=sflag, size = 0x4, scoped, tag = 'scoped memory for tpu_custom_call.1']
    #allocation4 [shape = 's32[1]{0}', space=sflag, size = 0x4, scoped, tag = 'scoped memory for tpu_custom_call.1']
    #allocation5 [shape = 'u8[16384]{0}', space=vmem, size = 0x4000, scoped, tag = 'input window, operand 3, single buffered']
    #allocation6 [shape = 's32[1]{0}', space=sflag, size = 0x4, scoped, tag = 'scoped memory for tpu_custom_call.1']
    #allocation7 [shape = 'u8[16384]{0}', space=vmem, size = 0x4000, scoped, tag = 'input window, operand 4, single buffered']
    #allocation8 [shape = 'u8[65536]{0}', space=vmem, size = 0x10000, scoped, tag = 'input window, operand 5, single buffered']
    #allocation9 [shape = 's32[1]{0}', space=sflag, size = 0x4, scoped, tag = 'scoped memory for tpu_custom_call.1']
    #allocation10 [shape = 'u8[1024]{0}', space=vmem, size = 0x400, scoped, tag = 'output window, operand 0, single buffered']
    %12 = vsyncpa [#allocation3], 0
    %13 = vsyncpa [#allocation6], 0
    %14 = vsyncpa [#allocation9], 0
    %15 = vsyncpa [#allocation4], 0
    // Predicated region
    $region2: #{tpu_custom_call.1} parent=1 // pred_check
      _
    $region3: #{tpu_custom_call.1} parent=1 // pred_check_branch
      %17 = sbr.rel (0) target = $region5
    $region4: #{tpu_custom_call.1} parent=1 // pred_region
      _
    $region5: #{tpu_custom_call.1} parent=1 // pred_fallthru
      _
    // Predicated region
    $region6: #{tpu_custom_call.1} parent=1 // pred_check
      _
    $region7: #{tpu_custom_call.1} parent=1 // pred_check_branch
      %19 = sbr.rel (0) target = $region9
    $region8: #{tpu_custom_call.1} parent=1 // pred_region
      %s21 = ssub.s32 32, 32
      %22 = vsyncadd [#allocation3], %s21
      %s24 = sshll.u32 [#allocation2], 4
      %s25 = int_to_ptr.vmem [resolvable:$true] %s24
      %27 = dma.hbm_to_vmem [thread:$0]  %s1, 32, %s25, [#allocation3]
    $region9: #{tpu_custom_call.1} parent=1 // pred_fallthru
      _
    // Predicated region
    $region10: #{tpu_custom_call.1} parent=1 // pred_check
      _
    $region11: #{tpu_custom_call.1} parent=1 // pred_check_branch
      %29 = sbr.rel (0) target = $region13
    $region12: #{tpu_custom_call.1} parent=1 // pred_region
      _
    $region13: #{tpu_custom_call.1} parent=1 // pred_fallthru
      _
    // Predicated region
    $region14: #{tpu_custom_call.1} parent=1 // pred_check
      _
    $region15: #{tpu_custom_call.1} parent=1 // pred_check_branch
      %31 = sbr.rel (0) target = $region17
    $region16: #{tpu_custom_call.1} parent=1 // pred_region
      %s33 = ssub.s32 512, 512
      %34 = vsyncadd [#allocation6], %s33
      %s35 = sshll.u32 [#allocation5], 4
      %s36 = int_to_ptr.vmem [resolvable:$true] %s35
      %41 = dma.hbm_to_vmem [thread:$0]  %s3, 512, %s36, [#allocation6], 128, 128, 8
    $region17: #{tpu_custom_call.1} parent=1 // pred_fallthru
      _
    // Predicated region
    $region18: #{tpu_custom_call.1} parent=1 // pred_check
      _
    $region19: #{tpu_custom_call.1} parent=1 // pred_check_branch
      %43 = sbr.rel (0) target = $region21
    $region20: #{tpu_custom_call.1} parent=1 // pred_region
      %s45 = ssub.s32 512, 512
      %46 = vsyncadd [#allocation6], %s45
      %s47 = sshll.u32 [#allocation7], 4
      %s48 = int_to_ptr.vmem [resolvable:$true] %s47
      %53 = dma.hbm_to_vmem [thread:$0]  %s4, 512, %s48, [#allocation6], 128, 128, 8
    $region21: #{tpu_custom_call.1} parent=1 // pred_fallthru
      _
    // Predicated region
    $region22: #{tpu_custom_call.1} parent=1 // pred_check
      _
    $region23: #{tpu_custom_call.1} parent=1 // pred_check_branch
      %55 = sbr.rel (0) target = $region25
    $region24: #{tpu_custom_call.1} parent=1 // pred_region
      %s57 = ssub.s32 2048, 2048
      %58 = vsyncadd [#allocation9], %s57
      %s59 = sshll.u32 [#allocation8], 4
      %s60 = int_to_ptr.vmem [resolvable:$true] %s59
      %65 = dma.hbm_to_vmem [thread:$0]  %s5, 2048, %s60, [#allocation9], 128, 128, 8
    $region25: #{tpu_custom_call.1} parent=1 // pred_fallthru
      _
    // Predicated region
    $region26: #{tpu_custom_call.1} parent=1 // pred_check
      _
    $region27: #{tpu_custom_call.1} parent=1 // pred_check_branch
      %67 = sbr.rel (0) target = $region29
    $region28: #{tpu_custom_call.1} parent=1 // pred_region
      _
    $region29: #{tpu_custom_call.1} parent=1 // pred_fallthru
      _
    // Predicated region
    $region30: #{tpu_custom_call.1} parent=1 // pred_check
      _
    $region31: #{tpu_custom_call.1} parent=1 // pred_check_branch
      %69 = sbr.rel (0) target = $region33
    $region32: #{tpu_custom_call.1} parent=1 // pred_region
      %70 = dma.done [#allocation3], 32
    $region33: #{tpu_custom_call.1} parent=1 // pred_fallthru
      _
    // Predicated region
    $region34: #{tpu_custom_call.1} parent=1 // pred_check
      _
    $region35: #{tpu_custom_call.1} parent=1 // pred_check_branch
      %72 = sbr.rel (0) target = $region37
    $region36: #{tpu_custom_call.1} parent=1 // pred_region
      %73 = dma.done [#allocation6], 512
    $region37: #{tpu_custom_call.1} parent=1 // pred_fallthru
      _
    // Predicated region
    $region38: #{tpu_custom_call.1} parent=1 // pred_check
      _
    $region39: #{tpu_custom_call.1} parent=1 // pred_check_branch
      %75 = sbr.rel (0) target = $region41
    $region40: #{tpu_custom_call.1} parent=1 // pred_region
      %76 = dma.done [#allocation6], 512
    $region41: #{tpu_custom_call.1} parent=1 // pred_fallthru
      _
    // Predicated region
    $region42: #{tpu_custom_call.1} parent=1 // pred_check
      _
    $region43: #{tpu_custom_call.1} parent=1 // pred_check_branch
      %78 = sbr.rel (0) target = $region45
    $region44: #{tpu_custom_call.1} parent=1 // pred_region
      %79 = dma.done [#allocation9], 2048
    $region45: #{tpu_custom_call.1} parent=1 // pred_fallthru
      _
    %v80 = vld [vmem:[%s2] sm:$0x3]
    %v81 = vld [vmem:[%s0] sm:$0x3]
    %v82 = vld [vmem:[#allocation5] sm:$0xff]
    %v83 = vld [vmem:[#allocation5 + $0x8] sm:$0xff]
    %v84 = vld [vmem:[#allocation5 + $0x10] sm:$0xff]
    %v85 = vld [vmem:[#allocation5 + $0x18] sm:$0xff]
    %vm86 = vcmask 261120
    %v88 = vsel %vm86, %v81, 0
    %90 = vmatprep.subr.mxu0 0.0
    %91 = vmatpush1.msra.mxu0 %v82
    %92 = vmatprep.subr.mxu0 0.0
    %93 = vmatpush1.msra.mxu0 %v83
    %94 = vmatprep.subr.mxu0 0.0
    %95 = vmatpush1.msra.mxu0 %v84
    %96 = vmatprep.subr.mxu0 0.0
    %97 = vmatpush1.msra.mxu0 %v85
    %98 = vmatprep.subr.mxu0 0.0
    %99 = vmatpush1.msra.mxu0 0.0
    %100 = vmatprep.subr.mxu0 0.0
    %101 = vmatpush1.msra.mxu0 0.0
    %102 = vmatprep.subr.mxu0 0.0
    %103 = vmatpush1.msra.mxu0 0.0
    %104 = vmatprep.subr.mxu0 0.0
    %105 = vmatpush1.msra.mxu0 0.0
    %106 = vmatprep.subr.mxu0 0.0
    %107 = vmatpush1.msra.mxu0 0.0
    %108 = vmatprep.subr.mxu0 0.0
    %109 = vmatpush1.msra.mxu0 0.0
    %110 = vmatprep.subr.mxu0 0.0
    %111 = vmatpush1.msra.mxu0 0.0
    %112 = vmatprep.subr.mxu0 0.0
    %113 = vmatpush1.msra.mxu0 0.0
    %114 = vmatprep.subr.mxu0 0.0
    %115 = vmatpush1.msra.mxu0 0.0
    %116 = vmatprep.subr.mxu0 0.0
    %117 = vmatpush1.msra.mxu0 0.0
    %118 = vmatprep.subr.mxu0 0.0
    %119 = vmatpush1.msra.mxu0 0.0
    %120 = vmatprep.subr.mxu0 0.0
    %121 = vmatpush1.msra.mxu0 0.0
    %122 = vmatprep.subr.mxu0 0.0
    %123 = vmatpush1.msra.mxu0 0.0
    %124 = vmatprep.subr.mxu0 0.0
    %125 = vmatpush1.msra.mxu0 0.0
    %126 = vmatprep.subr.mxu0 0.0
    %127 = vmatpush1.msra.mxu0 0.0
    %128 = vmatprep.subr.mxu0 0.0
    %129 = vmatpush1.msra.mxu0 0.0
    %130 = vmatprep.subr.mxu0 0.0
    %131 = vmatpush1.msra.mxu0 0.0
    %132 = vmatprep.subr.mxu0 0.0
    %133 = vmatpush1.msra.mxu0 0.0
    %134 = vmatprep.subr.mxu0 0.0
    %135 = vmatpush1.msra.mxu0 0.0
    %136 = vmatprep.subr.mxu0 0.0
    %137 = vmatpush1.msra.mxu0 0.0
    %138 = vmatprep.subr.mxu0 0.0
    %139 = vmatpush1.msra.mxu0 0.0
    %140 = vmatprep.subr.mxu0 0.0
    %141 = vmatpush1.msra.mxu0 0.0
    %142 = vmatprep.subr.mxu0 0.0
    %143 = vmatpush1.msra.mxu0 0.0
    %144 = vmatprep.subr.mxu0 0.0
    %145 = vmatpush1.msra.mxu0 0.0
    %146 = vmatprep.subr.mxu0 0.0
    %147 = vmatpush1.msra.mxu0 0.0
    %148 = vmatprep.subr.mxu0 0.0
    %149 = vmatpush1.msra.mxu0 0.0
    %150 = vmatprep.subr.mxu0 0.0
    %151 = vmatpush1.msra.mxu0 0.0
    %152 = vmatprep.subr.mxu0 0.0
    %153 = vmatpush1.msra.mxu0 0.0
    %154 = vmatprep.mubr.f32.mxu0 0.0
    %155 = vmatmul.mubr.f32.gmra.mrb[0].mxu0 %v88
    %v156 = vpop.f32.mrb[0].mxu0
    %v157 = vadd.f32 0.0, %v156
    %v158 = vpop.f32.mrb[0].mxu0
    %159 = vdwg.mxu0
    %v160 = vld [vmem:[#allocation2] sm:$0x3]
    %v161 = vld [vmem:[#allocation7] sm:$0xff]
    %v162 = vld [vmem:[#allocation7 + $0x8] sm:$0xff]
    %v163 = vld [vmem:[#allocation7 + $0x10] sm:$0xff]
    %v164 = vld [vmem:[#allocation7 + $0x18] sm:$0xff]
    %v166 = vsel %vm86, %v160, 0
    %168 = vmatprep.subr.mxu0 0.0
    %169 = vmatpush1.msra.mxu0 %v161
    %170 = vmatprep.subr.mxu0 0.0
    %171 = vmatpush1.msra.mxu0 %v162
    %172 = vmatprep.subr.mxu0 0.0
    %173 = vmatpush1.msra.mxu0 %v163
    %174 = vmatprep.subr.mxu0 0.0
    %175 = vmatpush1.msra.mxu0 %v164
    %176 = vmatprep.subr.mxu0 0.0
    %177 = vmatpush1.msra.mxu0 0.0
    %178 = vmatprep.subr.mxu0 0.0
    %179 = vmatpush1.msra.mxu0 0.0
    %180 = vmatprep.subr.mxu0 0.0
    %181 = vmatpush1.msra.mxu0 0.0
    %182 = vmatprep.subr.mxu0 0.0
    %183 = vmatpush1.msra.mxu0 0.0
    %184 = vmatprep.subr.mxu0 0.0
    %185 = vmatpush1.msra.mxu0 0.0
    %186 = vmatprep.subr.mxu0 0.0
    %187 = vmatpush1.msra.mxu0 0.0
    %188 = vmatprep.subr.mxu0 0.0
    %189 = vmatpush1.msra.mxu0 0.0
    %190 = vmatprep.subr.mxu0 0.0
    %191 = vmatpush1.msra.mxu0 0.0
    %192 = vmatprep.subr.mxu0 0.0
    %193 = vmatpush1.msra.mxu0 0.0
    %194 = vmatprep.subr.mxu0 0.0
    %195 = vmatpush1.msra.mxu0 0.0
    %196 = vmatprep.subr.mxu0 0.0
    %197 = vmatpush1.msra.mxu0 0.0
    %198 = vmatprep.subr.mxu0 0.0
    %199 = vmatpush1.msra.mxu0 0.0
    %200 = vmatprep.subr.mxu0 0.0
    %201 = vmatpush1.msra.mxu0 0.0
    %202 = vmatprep.subr.mxu0 0.0
    %203 = vmatpush1.msra.mxu0 0.0
    %204 = vmatprep.subr.mxu0 0.0
    %205 = vmatpush1.msra.mxu0 0.0
    %206 = vmatprep.subr.mxu0 0.0
    %207 = vmatpush1.msra.mxu0 0.0
    %208 = vmatprep.subr.mxu0 0.0
    %209 = vmatpush1.msra.mxu0 0.0
    %210 = vmatprep.subr.mxu0 0.0
    %211 = vmatpush1.msra.mxu0 0.0
    %212 = vmatprep.subr.mxu0 0.0
    %213 = vmatpush1.msra.mxu0 0.0
    %214 = vmatprep.subr.mxu0 0.0
    %215 = vmatpush1.msra.mxu0 0.0
    %216 = vmatprep.subr.mxu0 0.0
    %217 = vmatpush1.msra.mxu0 0.0
    %218 = vmatprep.subr.mxu0 0.0
    %219 = vmatpush1.msra.mxu0 0.0
    %220 = vmatprep.subr.mxu0 0.0
    %221 = vmatpush1.msra.mxu0 0.0
    %222 = vmatprep.subr.mxu0 0.0
    %223 = vmatpush1.msra.mxu0 0.0
    %224 = vmatprep.subr.mxu0 0.0
    %225 = vmatpush1.msra.mxu0 0.0
    %226 = vmatprep.subr.mxu0 0.0
    %227 = vmatpush1.msra.mxu0 0.0
    %228 = vmatprep.subr.mxu0 0.0
    %229 = vmatpush1.msra.mxu0 0.0
    %230 = vmatprep.subr.mxu0 0.0
    %231 = vmatpush1.msra.mxu0 0.0
    %232 = vmatprep.mubr.f32.mxu0 0.0
    %233 = vmatmul.mubr.f32.gmra.mrb[0].mxu0 %v166
    %v234 = vpop.f32.mrb[0].mxu0
    %v235 = vadd.f32 0.0, %v234
    %v236 = vpop.f32.mrb[0].mxu0
    %237 = vdwg.mxu0
    %v238 = vlaneseq
    %v239 = vand.u32 %v238, 127
    %vm240 = vcmp.lt.s32.totalorder %v239, 32
    %v241 = vsel %vm240, 1, 0
    %vm242 = vcmp.eq.s32.totalorder %v241, 1
    %244 = vset.pattern.permute.xlu0 0
    %245 = vperm.xlu0 %244, %v80
    %v246 = vpop.permute.xlu0 %245
    %v248 = vsel %vm242, 1.0, %v246
    %v249 = vsel %vm242, %v246, 1.0
    %v250 = vmul.f32 %v157, %v248
    %v251 = vmul.f32 %v235, %v249
    %v252 = vadd.f32 %v250, %v251
    %v253 = vld [vmem:[%s6] sm:$0x1]
    %v254 = vlaneseq
    %v255 = vshrl.u32 %v254, 7
    %v256 = vsub.s32 0, %v255
    %v257 = vrot.slane %v253, %v256
    %v258 = vadd.f32 %v252, %v257
    %v259 = vld [vmem:[#allocation8] sm:$0xff]
    %v260 = vld [vmem:[#allocation8 + $0x8] sm:$0xff]
    %v261 = vld [vmem:[#allocation8 + $0x10] sm:$0xff]
    %v262 = vld [vmem:[#allocation8 + $0x18] sm:$0xff]
    %v263 = vld [vmem:[#allocation8 + $0x20] sm:$0xff]
    %v264 = vld [vmem:[#allocation8 + $0x28] sm:$0xff]
    %v265 = vld [vmem:[#allocation8 + $0x30] sm:$0xff]
    %v266 = vld [vmem:[#allocation8 + $0x38] sm:$0xff]
    %v267 = vld [vmem:[#allocation8 + $0x40] sm:$0xff]
    %v268 = vld [vmem:[#allocation8 + $0x48] sm:$0xff]
    %v269 = vld [vmem:[#allocation8 + $0x50] sm:$0xff]
    %v270 = vld [vmem:[#allocation8 + $0x58] sm:$0xff]
    %v271 = vld [vmem:[#allocation8 + $0x60] sm:$0xff]
    %v272 = vld [vmem:[#allocation8 + $0x68] sm:$0xff]
    %v273 = vld [vmem:[#allocation8 + $0x70] sm:$0xff]
    %v274 = vld [vmem:[#allocation8 + $0x78] sm:$0xff]
    %275 = vmatprep.subr.mxu0 0.0
    %276 = vmatpush1.msra.mxu0 %v259
    %277 = vmatprep.subr.mxu0 0.0
    %278 = vmatpush1.msra.mxu0 %v260
    %279 = vmatprep.subr.mxu0 0.0
    %280 = vmatpush1.msra.mxu0 %v261
    %281 = vmatprep.subr.mxu0 0.0
    %282 = vmatpush1.msra.mxu0 %v262
    %283 = vmatprep.subr.mxu0 0.0
    %284 = vmatpush1.msra.mxu0 %v263
    %285 = vmatprep.subr.mxu0 0.0
    %286 = vmatpush1.msra.mxu0 %v264
    %287 = vmatprep.subr.mxu0 0.0
    %288 = vmatpush1.msra.mxu0 %v265
    %289 = vmatprep.subr.mxu0 0.0
    %290 = vmatpush1.msra.mxu0 %v266
    %291 = vmatprep.subr.mxu0 0.0
    %292 = vmatpush1.msra.mxu0 %v267
    %293 = vmatprep.subr.mxu0 0.0
    %294 = vmatpush1.msra.mxu0 %v268
    %295 = vmatprep.subr.mxu0 0.0
    %296 = vmatpush1.msra.mxu0 %v269
    %297 = vmatprep.subr.mxu0 0.0
    %298 = vmatpush1.msra.mxu0 %v270
    %299 = vmatprep.subr.mxu0 0.0
    %300 = vmatpush1.msra.mxu0 %v271
    %301 = vmatprep.subr.mxu0 0.0
    %302 = vmatpush1.msra.mxu0 %v272
    %303 = vmatprep.subr.mxu0 0.0
    %304 = vmatpush1.msra.mxu0 %v273
    %305 = vmatprep.subr.mxu0 0.0
    %306 = vmatpush1.msra.mxu0 %v274
    %307 = vmatprep.subr.mxu0 0.0
    %308 = vmatpush1.msra.mxu0 0.0
    %309 = vmatprep.subr.mxu0 0.0
    %310 = vmatpush1.msra.mxu0 0.0
    %311 = vmatprep.subr.mxu0 0.0
    %312 = vmatpush1.msra.mxu0 0.0
    %313 = vmatprep.subr.mxu0 0.0
    %314 = vmatpush1.msra.mxu0 0.0
    %315 = vmatprep.subr.mxu0 0.0
    %316 = vmatpush1.msra.mxu0 0.0
    %317 = vmatprep.subr.mxu0 0.0
    %318 = vmatpush1.msra.mxu0 0.0
    %319 = vmatprep.subr.mxu0 0.0
    %320 = vmatpush1.msra.mxu0 0.0
    %321 = vmatprep.subr.mxu0 0.0
    %322 = vmatpush1.msra.mxu0 0.0
    %323 = vmatprep.subr.mxu0 0.0
    %324 = vmatpush1.msra.mxu0 0.0
    %325 = vmatprep.subr.mxu0 0.0
    %326 = vmatpush1.msra.mxu0 0.0
    %327 = vmatprep.subr.mxu0 0.0
    %328 = vmatpush1.msra.mxu0 0.0
    %329 = vmatprep.subr.mxu0 0.0
    %330 = vmatpush1.msra.mxu0 0.0
    %331 = vmatprep.subr.mxu0 0.0
    %332 = vmatpush1.msra.mxu0 0.0
    %333 = vmatprep.subr.mxu0 0.0
    %334 = vmatpush1.msra.mxu0 0.0
    %335 = vmatprep.subr.mxu0 0.0
    %336 = vmatpush1.msra.mxu0 0.0
    %337 = vmatprep.subr.mxu0 0.0
    %338 = vmatpush1.msra.mxu0 0.0
    %339 = vmatprep.mubr.f32.mxu0 0.0
    %340 = vmatmul.mubr.f32.gmra.mrb[0].mxu0 %v258
    %v341 = vpop.f32.mrb[0].mxu0
    %v342 = vadd.f32 0.0, %v341
    %v343 = vpop.f32.mrb[0].mxu0
    %344 = vdwg.mxu0
    %v345 = vsub.f32 %v258, %v342
    %v346 = vmul.f32 %v345, %v345
    %347 = vmatprep.subr.mxu0 0.0
    %348 = vmatpush1.msra.mxu0 %v259
    %349 = vmatprep.subr.mxu0 0.0
    %350 = vmatpush1.msra.mxu0 %v260
    %351 = vmatprep.subr.mxu0 0.0
    %352 = vmatpush1.msra.mxu0 %v261
    %353 = vmatprep.subr.mxu0 0.0
    %354 = vmatpush1.msra.mxu0 %v262
    %355 = vmatprep.subr.mxu0 0.0
    %356 = vmatpush1.msra.mxu0 %v263
    %357 = vmatprep.subr.mxu0 0.0
    %358 = vmatpush1.msra.mxu0 %v264
    %359 = vmatprep.subr.mxu0 0.0
    %360 = vmatpush1.msra.mxu0 %v265
    %361 = vmatprep.subr.mxu0 0.0
    %362 = vmatpush1.msra.mxu0 %v266
    %363 = vmatprep.subr.mxu0 0.0
    %364 = vmatpush1.msra.mxu0 %v267
    %365 = vmatprep.subr.mxu0 0.0
    %366 = vmatpush1.msra.mxu0 %v268
    %367 = vmatprep.subr.mxu0 0.0
    %368 = vmatpush1.msra.mxu0 %v269
    %369 = vmatprep.subr.mxu0 0.0
    %370 = vmatpush1.msra.mxu0 %v270
    %371 = vmatprep.subr.mxu0 0.0
    %372 = vmatpush1.msra.mxu0 %v271
    %373 = vmatprep.subr.mxu0 0.0
    %374 = vmatpush1.msra.mxu0 %v272
    %375 = vmatprep.subr.mxu0 0.0
    %376 = vmatpush1.msra.mxu0 %v273
    %377 = vmatprep.subr.mxu0 0.0
    %378 = vmatpush1.msra.mxu0 %v274
    %379 = vmatprep.subr.mxu0 0.0
    %380 = vmatpush1.msra.mxu0 0.0
    %381 = vmatprep.subr.mxu0 0.0
    %382 = vmatpush1.msra.mxu0 0.0
    %383 = vmatprep.subr.mxu0 0.0
    %384 = vmatpush1.msra.mxu0 0.0
    %385 = vmatprep.subr.mxu0 0.0
    %386 = vmatpush1.msra.mxu0 0.0
    %387 = vmatprep.subr.mxu0 0.0
    %388 = vmatpush1.msra.mxu0 0.0
    %389 = vmatprep.subr.mxu0 0.0
    %390 = vmatpush1.msra.mxu0 0.0
    %391 = vmatprep.subr.mxu0 0.0
    %392 = vmatpush1.msra.mxu0 0.0
    %393 = vmatprep.subr.mxu0 0.0
    %394 = vmatpush1.msra.mxu0 0.0
    %395 = vmatprep.subr.mxu0 0.0
    %396 = vmatpush1.msra.mxu0 0.0
    %397 = vmatprep.subr.mxu0 0.0
    %398 = vmatpush1.msra.mxu0 0.0
    %399 = vmatprep.subr.mxu0 0.0
    %400 = vmatpush1.msra.mxu0 0.0
    %401 = vmatprep.subr.mxu0 0.0
    %402 = vmatpush1.msra.mxu0 0.0
    %403 = vmatprep.subr.mxu0 0.0
    %404 = vmatpush1.msra.mxu0 0.0
    %405 = vmatprep.subr.mxu0 0.0
    %406 = vmatpush1.msra.mxu0 0.0
    %407 = vmatprep.subr.mxu0 0.0
    %408 = vmatpush1.msra.mxu0 0.0
    %409 = vmatprep.subr.mxu0 0.0
    %410 = vmatpush1.msra.mxu0 0.0
    %411 = vmatprep.mubr.f32.mxu0 0.0
    %412 = vmatmul.mubr.f32.gmra.mrb[0].mxu0 %v346
    %v413 = vpop.f32.mrb[0].mxu0
    %v414 = vadd.f32 1e-05, %v413
    %v415 = vpop.f32.mrb[0].mxu0
    %416 = vdwg.mxu0
    %v417 = vrsqrt.pop %v414
    %v418 = vmul.f32 %v345, %v417
    %v419 = vld [vmem:[%s6 + $0x1] sm:$0x1]
    %v420 = vlaneseq
    %v421 = vshrl.u32 %v420, 7
    %v422 = vsub.s32 0, %v421
    %v423 = vrot.slane %v419, %v422
    %v424 = vmul.f32 %v418, %v423
    %v425 = vld [vmem:[%s6 + $0x2] sm:$0x1]
    %v426 = vlaneseq
    %v427 = vshrl.u32 %v426, 7
    %v428 = vsub.s32 0, %v427
    %v429 = vrot.slane %v425, %v428
    %v430 = vadd.f32 %v424, %v429
    %v431 = vmul.f32 %v430, 0.5
    %v432 = vmul.f32 %v430, 0.70710677
    %v433 = verf.f32.pop %v432
    %v434 = vadd.f32 %v433, 1.0
    %v435 = vmul.f32 %v431, %v434
    %436 = vst [vmem:[#allocation10] sm:$0x3] %v435
    // Predicated region
    $region46: #{tpu_custom_call.1} parent=1 // pred_check
      _
    $region47: #{tpu_custom_call.1} parent=1 // pred_check_branch
      %438 = sbr.rel (0) target = $region49
    $region48: #{tpu_custom_call.1} parent=1 // pred_region
      %s440 = ssub.s32 32, 32
      %441 = vsyncadd [#allocation4], %s440
      %s443 = sshll.u32 [#allocation10], 4
      %s444 = int_to_ptr.vmem [resolvable:$true] %s443
      %446 = dma.vmem_to_hbm [thread:$0]  %s444, 32, %s7, [#allocation4]
    $region49: #{tpu_custom_call.1} parent=1 // pred_fallthru
      _
    // Predicated region
    $region50: #{tpu_custom_call.1} parent=1 // pred_check
      _
    $region51: #{tpu_custom_call.1} parent=1 // pred_check_branch
      %448 = sbr.rel (0) target = $region53
    $region52: #{tpu_custom_call.1} parent=1 // pred_region
      %449 = dma.done [#allocation4], 32
    $region53: #{tpu_custom_call.1} parent=1 // pred_fallthru
      _
    %450 = vsyncpa [#allocation3], 1
    %451 = vsyncpa [#allocation6], 1
    %452 = vsyncpa [#allocation9], 1
    %453 = vsyncpa [#allocation4], 1

</llo_original>
